<compile_context>
chip_gen: v6e
topology: v6e:2x2x1
jax: 0.10.0
libtpu: 0.0.40
codegen_flags: <defaults>
</compile_context>

<pallas_src>
import functools

import jax
import jax.numpy as jnp
from jax import lax
from jax.experimental import pallas as pl
from jax.experimental.pallas import tpu as pltpu

EPS = 1e-12  # matches torch F.normalize default eps

_VMEM_TILE_BUDGET = 24 * 1024 * 1024   # target per-step working set (all generations)
_VMEM_LIMIT_BYTES = 48 * 1024 * 1024   # explicit scoped-VMEM limit (> v5e's 16 MiB default,
                                       # < v7x's 64 MiB physical VMEM)


def _round_up(x, m):
    return (x + m - 1) // m * m


def _pick_tiles(n, mult, max_tile):
    """Split round_up(n, mult) into equal `mult`-multiple tiles (each <= ~max_tile).

    Minimizes padding waste vs. a hard-coded tile (e.g. n=300 -> one 384 tile,
    not 512) while keeping every tile lane/sublane aligned.
    """
    n = max(int(n), 1)
    base = _round_up(n, mult)
    max_tile = max(_round_up(int(max_tile), mult), mult)
    n_tiles = -(-base // max_tile)
    tile = _round_up(-(-base // n_tiles), mult)
    return tile, tile * n_tiles


def _cosine_matmul_kernel(x_ref, w_ref, o_ref, acc_ref, *, precision):
    # Pure tiled matmul over pre-normalized operands.  K (feature) axis is the
    # innermost, sequential ("arbitrary") grid axis; acc is an f32 VMEM scratch.
    @pl.when(pl.program_id(2) == 0)
    def _():
        acc_ref[...] = jnp.zeros_like(acc_ref)

    acc_ref[...] += lax.dot_general(
        x_ref[...],
        w_ref[...],
        dimension_numbers=(((1,), (0,)), ((), ())),  # plain (M,K)x(K,N), no transpose
        preferred_element_type=jnp.float32,
        precision=precision,
    )

    @pl.when(pl.program_id(2) == pl.num_programs(2) - 1)
    def _():
        o_ref[...] = acc_ref[...].astype(o_ref.dtype)


def pseudo_target_classifier_logits(x, w, temperature=1.0, *, mxu_dtype=jnp.bfloat16):
    """x: (B, D) encodings, w: (C, D) classifier weights -> (B, C) f32 cosine logits.

    mxu_dtype=jnp.bfloat16 (default): fast path on v6e/v7x, ~1e-3 rel error.
    mxu_dtype=jnp.float32: exact path (precision=HIGHEST) for tight tolerances.
    """
    B, D = x.shape
    C, D2 = w.shape
    assert D == D2, "feature dims of encodings and classifier weights must match"

    mxu_dtype = jnp.dtype(mxu_dtype)
    op_bytes = mxu_dtype.itemsize
    exact = mxu_dtype == jnp.dtype(jnp.float32)
    precision = lax.Precision.HIGHEST if exact else None

    # --- Normalize once, outside the kernel (static weight + single pass over x).
    # torch F.normalize semantics: v / max(||v||, eps)  ==  v * rsqrt(max(||v||^2, eps^2)).
    xf = x.astype(jnp.float32)
    wf = w.astype(jnp.float32)
    inv_t = 1.0 / float(temperature)
    xn = xf * (inv_t * lax.rsqrt(
        jnp.maximum(jnp.sum(xf * xf, axis=-1, keepdims=True), EPS * EPS)))
    wn = wf * lax.rsqrt(
        jnp.maximum(jnp.sum(wf * wf, axis=-1, keepdims=True), EPS * EPS))
    wn_t = wn.T  # (D, C): one-time transpose so the MXU sees a plain (M,K)x(K,N)
    xn = xn.astype(mxu_dtype)
    wn_t = wn_t.astype(mxu_dtype)

    # --- Tile selection (minimize padding, cap at 512, lane/sublane aligned).
    row_mult = 8 if exact else 16          # bf16 packs two rows per sublane
    tb, b_pad = _pick_tiles(B, row_mult, 512)
    tc, c_pad = _pick_tiles(C, 128, 512)

    # K (feature) axis: keep the whole D per tile unless the double-buffered VMEM
    # working set exceeds the budget (important on v7x's 64 MiB VMEM / large D).
    fixed_bytes = 2 * tb * tc * 4 + tb * tc * 4            # out (double-buffered) + acc
    per_d_bytes = 2 * (tb + tc) * op_bytes                  # double-buffered x + w slabs
    d_full = _round_up(D, 128)
    d_fit = max(128, ((_VMEM_TILE_BUDGET - fixed_bytes) // per_d_bytes) // 128 * 128)
    if d_full <= d_fit:
        tk, d_pad = d_full, d_full
    else:
        tk, d_pad = _pick_tiles(D, 128, d_fit)

    if (b_pad, d_pad) != (B, D):
        xn = jnp.pad(xn, ((0, b_pad - B), (0, d_pad - D)))
    if (d_pad, c_pad) != (D, C):
        wn_t = jnp.pad(wn_t, ((0, d_pad - D), (0, c_pad - C)))

    kernel = functools.partial(_cosine_matmul_kernel, precision=precision)

    cost = pl.CostEstimate(
        flops=2 * b_pad * c_pad * d_pad,
        transcendentals=0,
        bytes_accessed=(b_pad * d_pad + d_pad * c_pad) * op_bytes + b_pad * c_pad * 4,
    )

    out = pl.pallas_call(
        kernel,
        out_shape=jax.ShapeDtypeStruct((b_pad, c_pad), jnp.float32),
        grid_spec=pltpu.PrefetchScalarGridSpec(
            num_scalar_prefetch=0,
            grid=(b_pad // tb, c_pad // tc, d_pad // tk),
            in_specs=[
                pl.BlockSpec((tb, tk), lambda i, j, k: (i, k)),  # normalized x tile
                pl.BlockSpec((tk, tc), lambda i, j, k: (k, j)),  # normalized W^T tile
            ],
            out_specs=pl.BlockSpec((tb, tc), lambda i, j, k: (i, j)),
            scratch_shapes=[pltpu.VMEM((tb, tc), jnp.float32)],   # f32 accumulator
        ),
        compiler_params=pltpu.CompilerParams(
            dimension_semantics=("parallel", "parallel", "arbitrary"),
            vmem_limit_bytes=_VMEM_LIMIT_BYTES,
        ),
        cost_estimate=cost,
    )(xn, wn_t)

    return out[:B, :C]


def reference_logits(x, w, temperature=1.0):
    xn = x / jnp.maximum(jnp.linalg.norm(x, axis=-1, keepdims=True), EPS)
    wn = w / jnp.maximum(jnp.linalg.norm(w, axis=-1, keepdims=True), EPS)
    return (xn @ wn.T) / temperature


if __name__ == "__main__":
    key = jax.random.PRNGKey(0)
    kx, kw, kx2, kw2 = jax.random.split(key, 4)

    # Small shapes consistent with the module's forward:
    #   num_features D = 32, base_class C = 16, batch B = 8.
    B, D, C = 8, 32, 16
    x = jax.random.normal(kx, (B, D), dtype=jnp.float32)    # encodings
    w = jax.random.normal(kw, (C, D), dtype=jnp.float32)    # base_fc.weight (C, D)
    ref = reference_logits(x, w, temperature=1.0)

    # Fast path (bf16 MXU operands, f32 accumulation).
    out = jax.block_until_ready(pseudo_target_classifier_logits(x, w, temperature=1.0))
    assert out.shape == (B, C)
    assert jnp.allclose(out, ref, atol=2e-2, rtol=2e-2)

    # Exact path (f32 operands, precision=HIGHEST).
    out_f32 = jax.block_until_ready(
        pseudo_target_classifier_logits(x, w, temperature=1.0, mxu_dtype=jnp.float32))
    assert jnp.allclose(out_f32, ref, atol=2e-5, rtol=2e-5)

    # Multi-tile path: exercises grid > 1 on the B and C axes, padding-minimizing
    # tile selection, and a folded non-unit temperature.
    B2, D2, C2 = 600, 300, 700
    x2 = jax.random.normal(kx2, (B2, D2), dtype=jnp.float32)
    w2 = jax.random.normal(kw2, (C2, D2), dtype=jnp.float32)
    out2 = jax.block_until_ready(
        pseudo_target_classifier_logits(x2, w2, temperature=0.5))
    ref2 = reference_logits(x2, w2, temperature=0.5)
    assert out2.shape == (B2, C2)
    assert jnp.allclose(out2, ref2, atol=2e-2, rtol=2e-2)

    print("KERNEL_OK")
</pallas_src>

<mosaic_0001>
module attributes {stable_mosaic.version = 11 : i64} {
  func.func @_cosine_matmul_kernel(%arg0: i32, %arg1: i32, %arg2: i32, %arg3: memref<16x128xbf16, #tpu.memory_space<vmem>>, %arg4: memref<128x128xbf16, #tpu.memory_space<vmem>>, %arg5: memref<16x128xf32, #tpu.memory_space<vmem>>, %arg6: memref<16x128xf32, #tpu.memory_space<vmem>>) attributes {dimension_semantics = [#tpu.dimension_semantics<parallel>, #tpu.dimension_semantics<parallel>, #tpu.dimension_semantics<arbitrary>], iteration_bounds = array<i64: 1, 1, 1>, scalar_prefetch = 0 : i64, scratch_operands = 1 : i64, tpu.core_type = #tpu.core_type<tc>, window_params = [{transform_indices = @transform_0, window_bounds = array<i64: 16, 128>}, {transform_indices = @transform_1, window_bounds = array<i64: 128, 128>}, {transform_indices = @transform_2, window_bounds = array<i64: 16, 128>}]} {
    %c0_i32 = arith.constant 0 : i32
    %0 = arith.cmpi eq, %arg2, %c0_i32 : i32
    %1 = arith.extui %0 : i1 to i32
    %c0_i32_0 = arith.constant 0 : i32
    %2 = arith.cmpi ne, %1, %c0_i32_0 : i32
    scf.if %2 {
      %cst_10 = arith.constant 0.000000e+00 : f32
      %12 = vector.broadcast %cst_10 : f32 to vector<16x128xf32>
      %c0_11 = arith.constant 0 : index
      %c0_12 = arith.constant 0 : index
      %13 = vector.load %arg6[%c0_11, %c0_12] : memref<16x128xf32, #tpu.memory_space<vmem>>, vector<16x128xf32>
      tpu.vector_store %arg6[%c0_11, %c0_12], %12 {strides = array<i32>} : memref<16x128xf32, #tpu.memory_space<vmem>>, vector<16x128xf32>,
    } else {
    }
    %c0 = arith.constant 0 : index
    %c0_1 = arith.constant 0 : index
    %3 = vector.load %arg6[%c0, %c0_1] : memref<16x128xf32, #tpu.memory_space<vmem>>, vector<16x128xf32>
    %c0_2 = arith.constant 0 : index
    %c0_3 = arith.constant 0 : index
    %4 = vector.load %arg3[%c0_2, %c0_3] : memref<16x128xbf16, #tpu.memory_space<vmem>>, vector<16x128xbf16>
    %c0_4 = arith.constant 0 : index
    %c0_5 = arith.constant 0 : index
    %5 = vector.load %arg4[%c0_4, %c0_5] : memref<128x128xbf16, #tpu.memory_space<vmem>>, vector<128x128xbf16>
    %cst = arith.constant dense<0.000000e+00> : vector<16x128xf32>
    %6 = tpu.matmul %4, %5, %cst {dimension_numbers = #tpu.dot_dimension_numbers<[1], [0], [0], [1], [0, 0, 1, 1], [], []>} : vector<16x128xbf16>, vector<128x128xbf16>, vector<16x128xf32> -> vector<16x128xf32>
    %7 = arith.addf %3, %6 : vector<16x128xf32>
    %c0_6 = arith.constant 0 : index
    %c0_7 = arith.constant 0 : index
    %8 = vector.load %arg6[%c0_6, %c0_7] : memref<16x128xf32, #tpu.memory_space<vmem>>, vector<16x128xf32>
    tpu.vector_store %arg6[%c0_6, %c0_7], %7 {strides = array<i32>} : memref<16x128xf32, #tpu.memory_space<vmem>>, vector<16x128xf32>,
    %c0_i32_8 = arith.constant 0 : i32
    %9 = arith.cmpi eq, %arg2, %c0_i32_8 : i32
    %10 = arith.extui %9 : i1 to i32
    %c0_i32_9 = arith.constant 0 : i32
    %11 = arith.cmpi ne, %10, %c0_i32_9 : i32
    scf.if %11 {
      %c0_10 = arith.constant 0 : index
      %c0_11 = arith.constant 0 : index
      %12 = vector.load %arg6[%c0_10, %c0_11] : memref<16x128xf32, #tpu.memory_space<vmem>>, vector<16x128xf32>
      %c0_12 = arith.constant 0 : index
      %c0_13 = arith.constant 0 : index
      %13 = vector.load %arg5[%c0_12, %c0_13] : memref<16x128xf32, #tpu.memory_space<vmem>>, vector<16x128xf32>
      tpu.vector_store %arg5[%c0_12, %c0_13], %12 {strides = array<i32>} : memref<16x128xf32, #tpu.memory_space<vmem>>, vector<16x128xf32>,
    } else {
    }
    return
  }
  func.func @transform_0(%arg0: i32, %arg1: i32, %arg2: i32) -> (i32, i32) {
    %c0_i32 = arith.constant 0 : i32
    return %arg0, %arg2 : i32, i32
  }
  func.func @transform_1(%arg0: i32, %arg1: i32, %arg2: i32) -> (i32, i32) {
    %c0_i32 = arith.constant 0 : i32
    return %arg2, %arg1 : i32, i32
  }
  func.func @transform_2(%arg0: i32, %arg1: i32, %arg2: i32) -> (i32, i32) {
    %c0_i32 = arith.constant 0 : i32
    return %arg0, %arg1 : i32, i32
  }
}

</mosaic_0001>

<llo_original>
// kernel: tpu_custom_call.1
$region0: #{tpu_custom_call.1}
  #allocation0 [shape = 'u32[]', space=smem, size = 0x4, offset = 0x4, fixed_abs, tag = 'smem constant byte address 0x4 - core index']
  #allocation1 [shape = 'u32[144,128]{1,0:T(1,128)}', space=vmem, size = 0x12000, scoped, tag = 'internal scratch']
  #allocation2 [shape = 'f32[16,128]{1,0:T(8,128)}', space=vmem, size = 0x2000, scoped, tag = 'scratch operand']
  %s0 = inlined_call_operand.hbm [shape: bf16[16,128], index: 0, kind: input, shape index: {}]
  %s1 = inlined_call_operand.hbm [shape: bf16[128,128], index: 1, kind: input, shape index: {}]
  %s2 = inlined_call_operand.hbm [shape: f32[16,128], index: 2, kind: output, shape index: {}]
  %s3 = sld [smem:[#allocation0]]
  $region34: #{tpu_custom_call.1} parent=0
    _
  %s5 = ssub.s32 1, %s3
  %s6 = scalar_select 0, %s5, %s3
  $region1: #{tpu_custom_call.1} parent=0
    #allocation3 [shape = 'u8[4096]{0}', space=vmem, size = 0x1000, scoped, tag = 'input window, operand 0, single buffered']
    #allocation4 [shape = 's32[1]{0}', space=sflag, size = 0x4, scoped, tag = 'scoped memory for tpu_custom_call.1']
    #allocation5 [shape = 's32[1]{0}', space=sflag, size = 0x4, scoped, tag = 'scoped memory for tpu_custom_call.1']
    #allocation6 [shape = 'u8[32768]{0}', space=vmem, size = 0x8000, scoped, tag = 'input window, operand 1, single buffered']
    #allocation7 [shape = 's32[1]{0}', space=sflag, size = 0x4, scoped, tag = 'scoped memory for tpu_custom_call.1']
    #allocation8 [shape = 'u8[8192]{0}', space=vmem, size = 0x2000, scoped, tag = 'output window, operand 0, single buffered']
    %7 = vsyncpa [#allocation4], 0
    %8 = vsyncpa [#allocation7], 0
    %9 = vsyncpa [#allocation5], 0
    // Predicated region
    $region2: #{tpu_custom_call.1} parent=1 // pred_check
      _
    $region3: #{tpu_custom_call.1} parent=1 // pred_check_branch
      %11 = sbr.rel (0) target = $region5
    $region4: #{tpu_custom_call.1} parent=1 // pred_region
      %s13 = ssub.s32 128, 128
      %14 = vsyncadd [#allocation4], %s13
      %s15 = sshll.u32 [#allocation3], 4
      %s16 = int_to_ptr.vmem [resolvable:$true] %s15
      %21 = dma.hbm_to_vmem [thread:$0]  %s0, 128, %s16, [#allocation4], 64, 64, 4
    $region5: #{tpu_custom_call.1} parent=1 // pred_fallthru
      _
    // Predicated region
    $region6: #{tpu_custom_call.1} parent=1 // pred_check
      _
    $region7: #{tpu_custom_call.1} parent=1 // pred_check_branch
      %23 = sbr.rel (0) target = $region9
    $region8: #{tpu_custom_call.1} parent=1 // pred_region
      %s25 = ssub.s32 1024, 1024
      %26 = vsyncadd [#allocation7], %s25
      %s27 = sshll.u32 [#allocation6], 4
      %s28 = int_to_ptr.vmem [resolvable:$true] %s27
      %33 = dma.hbm_to_vmem [thread:$0]  %s1, 1024, %s28, [#allocation7], 64, 64, 4
    $region9: #{tpu_custom_call.1} parent=1 // pred_fallthru
      _
    // Predicated region
    $region10: #{tpu_custom_call.1} parent=1 // pred_check
      _
    $region11: #{tpu_custom_call.1} parent=1 // pred_check_branch
      %35 = sbr.rel (0) target = $region13
    $region12: #{tpu_custom_call.1} parent=1 // pred_region
      %36 = dma.done [#allocation4], 128
    $region13: #{tpu_custom_call.1} parent=1 // pred_fallthru
      _
    // Predicated region
    $region14: #{tpu_custom_call.1} parent=1 // pred_check
      _
    $region15: #{tpu_custom_call.1} parent=1 // pred_check_branch
      %38 = sbr.rel (0) target = $region17
    $region16: #{tpu_custom_call.1} parent=1 // pred_region
      %39 = dma.done [#allocation7], 1024
    $region17: #{tpu_custom_call.1} parent=1 // pred_fallthru
      _
    %p41 = scmp.eq.s32.totalorder 0, 0
    // Predicated region
    $region18: #{tpu_custom_call.1} parent=1 // pred_check
      %p42 = pneg %p41
    $region19: #{tpu_custom_call.1} parent=1 // pred_check_branch
      %44 = sbr.rel (%p42) target = $region21
    $region20: #{tpu_custom_call.1} parent=1 // pred_region
      %45 = vst [vmem:[#allocation2] sm:$0xff] 0.0
      %46 = vst [vmem:[#allocation2 + $0x8] sm:$0xff] 0.0
    $region21: #{tpu_custom_call.1} parent=1 // pred_fallthru
      _
    %v47 = vld [vmem:[#allocation2] sm:$0xff]
    %v48 = vld [vmem:[#allocation2 + $0x8] sm:$0xff]
    %v49 = vld [vmem:[#allocation3] sm:$0xf]
    %v50 = vld [vmem:[#allocation3 + $0x4] sm:$0xf]
    %v51 = vld [vmem:[#allocation6] sm:$0xf]
    %v52 = vld [vmem:[#allocation6 + $0x4] sm:$0xf]
    %v53 = vld [vmem:[#allocation6 + $0x8] sm:$0xf]
    %v54 = vld [vmem:[#allocation6 + $0xc] sm:$0xf]
    %v55 = vld [vmem:[#allocation6 + $0x10] sm:$0xf]
    %v56 = vld [vmem:[#allocation6 + $0x14] sm:$0xf]
    %v57 = vld [vmem:[#allocation6 + $0x18] sm:$0xf]
    %v58 = vld [vmem:[#allocation6 + $0x1c] sm:$0xf]
    %v59 = vld [vmem:[#allocation6 + $0x20] sm:$0xf]
    %v60 = vld [vmem:[#allocation6 + $0x24] sm:$0xf]
    %v61 = vld [vmem:[#allocation6 + $0x28] sm:$0xf]
    %v62 = vld [vmem:[#allocation6 + $0x2c] sm:$0xf]
    %v63 = vld [vmem:[#allocation6 + $0x30] sm:$0xf]
    %v64 = vld [vmem:[#allocation6 + $0x34] sm:$0xf]
    %v65 = vld [vmem:[#allocation6 + $0x38] sm:$0xf]
    %v66 = vld [vmem:[#allocation6 + $0x3c] sm:$0xf]
    %v69 = vunpack.c.l.b16 %v49
    %v70 = vunpack.c.l.b16 %v50
    %v71 = vpack.c.b16 %v70, %v69
    %v89 = vunpack.c.l.b16 %v51
    %v90 = vunpack.c.l.b16 %v52
    %v91 = vunpack.c.l.b16 %v53
    %v92 = vunpack.c.l.b16 %v54
    %v93 = vunpack.c.l.b16 %v55
    %v94 = vunpack.c.l.b16 %v56
    %v95 = vunpack.c.l.b16 %v57
    %v96 = vunpack.c.l.b16 %v58
    %v97 = vunpack.c.l.b16 %v59
    %v98 = vunpack.c.l.b16 %v60
    %v99 = vunpack.c.l.b16 %v61
    %v100 = vunpack.c.l.b16 %v62
    %v101 = vunpack.c.l.b16 %v63
    %v102 = vunpack.c.l.b16 %v64
    %v103 = vunpack.c.l.b16 %v65
    %v104 = vunpack.c.l.b16 %v66
    %v105 = vpack.c.b16 %v90, %v89
    %v106 = vpack.c.b16 %v92, %v91
    %v107 = vpack.c.b16 %v94, %v93
    %v108 = vpack.c.b16 %v96, %v95
    %v109 = vpack.c.b16 %v98, %v97
    %v110 = vpack.c.b16 %v100, %v99
    %v111 = vpack.c.b16 %v102, %v101
    %v112 = vpack.c.b16 %v104, %v103
    %121 = vmatprep.subr.bf16.mxu0 0
    %122 = vmatpush1.bf16.msra.mxu0 %v112
    %123 = vmatprep.subr.bf16.mxu0 0
    %124 = vmatpush1.bf16.msra.mxu0 %v111
    %125 = vmatprep.subr.bf16.mxu0 0
    %126 = vmatpush1.bf16.msra.mxu0 %v110
    %127 = vmatprep.subr.bf16.mxu0 0
    %128 = vmatpush1.bf16.msra.mxu0 %v109
    %129 = vmatprep.subr.bf16.mxu0 0
    %130 = vmatpush1.bf16.msra.mxu0 %v108
    %131 = vmatprep.subr.bf16.mxu0 0
    %132 = vmatpush1.bf16.msra.mxu0 %v107
    %133 = vmatprep.subr.bf16.mxu0 0
    %134 = vmatpush1.bf16.msra.mxu0 %v106
    %135 = vmatprep.subr.bf16.mxu0 0
    %136 = vmatpush1.bf16.msra.mxu0 %v105
    %137 = vmatprep.subr.bf16.mxu0 0
    %138 = vmatpush2.bf16.msra.mxu0 0
    %139 = vmatprep.subr.bf16.mxu0 0
    %140 = vmatpush2.bf16.msra.mxu0 0
    %141 = vmatprep.subr.bf16.mxu0 0
    %142 = vmatpush2.bf16.msra.mxu0 0
    %143 = vmatprep.subr.bf16.mxu0 0
    %144 = vmatpush2.bf16.msra.mxu0 0
    %145 = vmatprep.subr.bf16.mxu0 0
    %146 = vmatpush2.bf16.msra.mxu0 0
    %147 = vmatprep.subr.bf16.mxu0 0
    %148 = vmatpush2.bf16.msra.mxu0 0
    %149 = vmatprep.subr.bf16.mxu0 0
    %150 = vmatpush2.bf16.msra.mxu0 0
    %151 = vmatprep.subr.bf16.mxu0 0
    %152 = vmatpush2.bf16.msra.mxu0 0
    %153 = vmatprep.mubr.bf16.mxu0 0
    %154 = vmatmul.mubr.bf16.gmra.mxu0 %v71
    %v155 = vpop.f32.mrf.mxu0
    %v156 = vadd.f32 0.0, %v155
    %v157 = vpop.f32.mrf.mxu0
    %v158 = vpop.f32.mrf.mxu0
    %v159 = vadd.f32 0.0, %v158
    %v160 = vpop.f32.mrf.mxu0
    %161 = vdwg.mxu0
    %v162 = vadd.f32 %v47, %v156
    %v163 = vadd.f32 %v48, %v159
    %164 = vst [vmem:[#allocation2] sm:$0xff] %v162
    %165 = vst [vmem:[#allocation2 + $0x8] sm:$0xff] %v163
    // Predicated region
    $region22: #{tpu_custom_call.1} parent=1 // pred_check
      %p166 = pneg %p41
    $region23: #{tpu_custom_call.1} parent=1 // pred_check_branch
      %168 = sbr.rel (%p166) target = $region25
    $region24: #{tpu_custom_call.1} parent=1 // pred_region
      %v169 = vld [vmem:[#allocation2] sm:$0xff]
      %v170 = vld [vmem:[#allocation2 + $0x8] sm:$0xff]
      %171 = vst [vmem:[#allocation8] sm:$0xff] %v169
      %172 = vst [vmem:[#allocation8 + $0x8] sm:$0xff] %v170
    $region25: #{tpu_custom_call.1} parent=1 // pred_fallthru
      _
    // Predicated region
    $region26: #{tpu_custom_call.1} parent=1 // pred_check
      _
    $region27: #{tpu_custom_call.1} parent=1 // pred_check_branch
      %174 = sbr.rel (0) target = $region29
    $region28: #{tpu_custom_call.1} parent=1 // pred_region
      %s176 = ssub.s32 256, 256
      %177 = vsyncadd [#allocation5], %s176
      %s178 = sshll.u32 [#allocation8], 4
      %s179 = int_to_ptr.vmem [resolvable:$true] %s178
      %184 = dma.vmem_to_hbm [thread:$0]  %s179, 256, %s2, [#allocation5], 128, 128, 8
    $region29: #{tpu_custom_call.1} parent=1 // pred_fallthru
      _
    // Predicated region
    $region30: #{tpu_custom_call.1} parent=1 // pred_check
      _
    $region31: #{tpu_custom_call.1} parent=1 // pred_check_branch
      %186 = sbr.rel (0) target = $region33
    $region32: #{tpu_custom_call.1} parent=1 // pred_region
      %187 = dma.done [#allocation5], 256
    $region33: #{tpu_custom_call.1} parent=1 // pred_fallthru
      _
    %188 = vsyncpa [#allocation4], 1
    %189 = vsyncpa [#allocation7], 1
    %190 = vsyncpa [#allocation5], 1

</llo_original>
